<compile_context>
chip_gen: v5e
topology: v5e:2x2
jax: 0.10.0
libtpu: 0.0.40
codegen_flags: <defaults>
</compile_context>

<pallas_src>
import functools

import jax
import jax.numpy as jnp
from jax.experimental import pallas as pl
from jax.experimental.pallas import tpu as pltpu


def _cdiv(a, b):
    return (a + b - 1) // b


def _round_up(x, m):
    return _cdiv(x, m) * m


def simplenet_kernel(w_ref, b_ref, x_ref, o_ref):
    """Fused affine map, feature-major, sublane+lane dense, pure VPU.

    w_ref: (OUT, IN)       f32 in SMEM (scalar reads)
    b_ref: (OUT,)          f32 in SMEM
    x_ref: (IN,  8, CHUNK) f32 in VMEM  (8*CHUNK batch elements, dense vregs)
    o_ref: (OUT, 8, CHUNK) f32 in VMEM
    """
    out_f, in_f = w_ref.shape

    # Hoist the IN feature-slab loads out of the output loop: 4 vld per column
    # group instead of 16 (don't rely on Mosaic to CSE repeated ref reads).
    xs = [x_ref[k] for k in range(in_f)]

    for o in range(out_f):
        acc = w_ref[o, 0] * xs[0]
        for k in range(1, in_f):
            acc = acc + w_ref[o, k] * xs[k]          # scalar-broadcast FMA on VPU
        o_ref[o] = (acc + b_ref[o]).astype(o_ref.dtype)   # dense, unmasked vst


def _pick_chunk(batch, max_chunk):
    """chunk = lanes per (8, chunk) slab; one grid step covers 8*chunk rows."""
    min_chunk = 128
    # Once there is enough work, aim for >= 2 grid steps so the "parallel" grid
    # axis can be split across both TensorCores on v7x.
    steps = 2 if batch >= 2 * 8 * min_chunk else 1
    chunk = _round_up(_cdiv(batch, 8 * steps), min_chunk)
    return max(min_chunk, min(max_chunk, chunk))


@functools.partial(jax.jit, static_argnames=("max_chunk",))
def simplenet_forward(x, params, max_chunk=4096):
    """x: (B, 4) f32. params: w1..w4 stored (in, out), b1..b4 stored (1, out)."""
    B, in_f = x.shape
    out_f = params["w4"].shape[1]

    # --- collapse the 4 affine layers into one (exact: no activations) -------
    w_eff = params["w1"] @ params["w2"] @ params["w3"] @ params["w4"]        # (4, 4)
    b_eff = ((params["b1"] @ params["w2"] + params["b2"]) @ params["w3"]
             + params["b3"]) @ params["w4"] + params["b4"]                    # (1, 4)
    w_t = w_eff.T                 # (out, in): y[o] = sum_k w_t[o, k] * x[k]
    b_vec = b_eff.reshape(-1)     # (out,)

    # --- block geometry -------------------------------------------------------
    chunk = _pick_chunk(B, max_chunk)     # lanes per slab (multiple of 128)
    cols = 8 * chunk                      # batch elements per grid step
    b_pad = _round_up(B, cols)
    n_steps = b_pad // cols
    # Per-step VMEM: (in+out) * 8*chunk*4B, double buffered ~= 64*chunk bytes;
    # chunk<=4096 -> ~2 MiB, far under every chip's scoped-VMEM default.

    # Feature-major, sublane-dense view:
    #   (B, 4) -> pad -> (4, b_pad) -> (4, 8, b_pad // 8)
    # pad + transpose + reshape fuse into a single relayout pass (the previous
    # zeros().at[].set() cost an additional full HBM pass).
    x_fm = jnp.pad(x, ((0, b_pad - B), (0, 0))).T.reshape(in_f, 8, b_pad // 8)

    out_fm = pl.pallas_call(
        simplenet_kernel,
        out_shape=jax.ShapeDtypeStruct((out_f, 8, b_pad // 8), x.dtype),
        grid=(n_steps,),
        in_specs=[
            pl.BlockSpec(memory_space=pltpu.MemorySpace.SMEM),    # W_eff^T, resident
            pl.BlockSpec(memory_space=pltpu.MemorySpace.SMEM),    # b_eff,   resident
            pl.BlockSpec((in_f, 8, chunk), lambda i: (0, 0, i)),  # streamed x slab
        ],
        out_specs=pl.BlockSpec((out_f, 8, chunk), lambda i: (0, 0, i)),
        compiler_params=pltpu.CompilerParams(
            dimension_semantics=("parallel",),      # megacore split on v7x
        ),
    )(w_t, b_vec, x_fm)

    # Back to the module's row-major (B, 4) contract (padded tail sliced off).
    return out_fm.reshape(out_f, b_pad)[:, :B].T


def init_params(key):
    """PyTorch-default-like Linear init: U(-1/sqrt(fan_in), 1/sqrt(fan_in))."""
    dims = [(4, 8), (8, 4), (4, 4), (4, 4)]
    params = {}
    keys = jax.random.split(key, 2 * len(dims))
    for i, (fan_in, fan_out) in enumerate(dims):
        bound = 1.0 / (fan_in ** 0.5)
        params[f"w{i + 1}"] = jax.random.uniform(
            keys[2 * i], (fan_in, fan_out), minval=-bound, maxval=bound,
            dtype=jnp.float32)
        params[f"b{i + 1}"] = jax.random.uniform(
            keys[2 * i + 1], (1, fan_out), minval=-bound, maxval=bound,
            dtype=jnp.float32)
    return params


def reference_forward(x, params):
    h = x
    for i in range(1, 5):
        h = h @ params[f"w{i}"] + params[f"b{i}"]
    return h


if __name__ == "__main__":
    key = jax.random.PRNGKey(0)
    pkey, xkey, xkey2 = jax.random.split(key, 3)
    params = init_params(pkey)

    # Small batch: single grid step (128-lane chunk), exercises padding.
    batch = 300
    x = jax.random.normal(xkey, (batch, 4), dtype=jnp.float32)
    out = jax.block_until_ready(simplenet_forward(x, params))
    ref = reference_forward(x, params)
    assert out.shape == (batch, 4)
    assert jnp.allclose(out, ref, atol=1e-5, rtol=1e-4), "mismatch vs reference"

    # Larger batch: exercises a multi-step ("parallel") grid + tail padding.
    batch2 = 2500
    x2 = jax.random.normal(xkey2, (batch2, 4), dtype=jnp.float32)
    out2 = jax.block_until_ready(simplenet_forward(x2, params))
    ref2 = reference_forward(x2, params)
    assert out2.shape == (batch2, 4)
    assert jnp.allclose(out2, ref2, atol=1e-5, rtol=1e-4), "mismatch vs reference"

    print("KERNEL_OK")
</pallas_src>

<mosaic_0001>
module attributes {stable_mosaic.version = 11 : i64} {
  func.func @simplenet_kernel(%arg0: i32, %arg1: memref<4x4xf32, #tpu.memory_space<smem>>, %arg2: memref<4xf32, #tpu.memory_space<smem>>, %arg3: memref<4x8x128xf32, #tpu.memory_space<vmem>>, %arg4: memref<4x8x128xf32, #tpu.memory_space<vmem>>) attributes {dimension_semantics = [#tpu.dimension_semantics<parallel>], iteration_bounds = array<i64: 1>, scalar_prefetch = 0 : i64, scratch_operands = 0 : i64, tpu.core_type = #tpu.core_type<tc>, window_params = [{transform_indices = @transform_0, window_bounds = array<i64: 4, 4>}, {transform_indices = @transform_1, window_bounds = array<i64: 4>}, {transform_indices = @transform_2, window_bounds = array<i64: 4, 8, 128>}, {transform_indices = @transform_3, window_bounds = array<i64: 4, 8, 128>}]} {
    %c0 = arith.constant 0 : index
    %c0_0 = arith.constant 0 : index
    %c0_1 = arith.constant 0 : index
    %0 = vector.load %arg3[%c0, %c0_0, %c0_1] : memref<4x8x128xf32, #tpu.memory_space<vmem>>, vector<1x8x128xf32>
    %1 = vector.shape_cast %0 : vector<1x8x128xf32> to vector<8x128xf32>
    %c1 = arith.constant 1 : index
    %c0_2 = arith.constant 0 : index
    %c0_3 = arith.constant 0 : index
    %2 = vector.load %arg3[%c1, %c0_2, %c0_3] : memref<4x8x128xf32, #tpu.memory_space<vmem>>, vector<1x8x128xf32>
    %3 = vector.shape_cast %2 : vector<1x8x128xf32> to vector<8x128xf32>
    %c2 = arith.constant 2 : index
    %c0_4 = arith.constant 0 : index
    %c0_5 = arith.constant 0 : index
    %4 = vector.load %arg3[%c2, %c0_4, %c0_5] : memref<4x8x128xf32, #tpu.memory_space<vmem>>, vector<1x8x128xf32>
    %5 = vector.shape_cast %4 : vector<1x8x128xf32> to vector<8x128xf32>
    %c3 = arith.constant 3 : index
    %c0_6 = arith.constant 0 : index
    %c0_7 = arith.constant 0 : index
    %6 = vector.load %arg3[%c3, %c0_6, %c0_7] : memref<4x8x128xf32, #tpu.memory_space<vmem>>, vector<1x8x128xf32>
    %7 = vector.shape_cast %6 : vector<1x8x128xf32> to vector<8x128xf32>
    %c0_8 = arith.constant 0 : index
    %c0_9 = arith.constant 0 : index
    %8 = memref.load %arg1[%c0_8, %c0_9] : memref<4x4xf32, #tpu.memory_space<smem>>
    %9 = vector.broadcast %8 : f32 to vector<8x128xf32>
    %10 = arith.mulf %9, %1 : vector<8x128xf32>
    %c0_10 = arith.constant 0 : index
    %c1_11 = arith.constant 1 : index
    %11 = memref.load %arg1[%c0_10, %c1_11] : memref<4x4xf32, #tpu.memory_space<smem>>
    %12 = vector.broadcast %11 : f32 to vector<8x128xf32>
    %13 = arith.mulf %12, %3 : vector<8x128xf32>
    %14 = arith.addf %10, %13 : vector<8x128xf32>
    %c0_12 = arith.constant 0 : index
    %c2_13 = arith.constant 2 : index
    %15 = memref.load %arg1[%c0_12, %c2_13] : memref<4x4xf32, #tpu.memory_space<smem>>
    %16 = vector.broadcast %15 : f32 to vector<8x128xf32>
    %17 = arith.mulf %16, %5 : vector<8x128xf32>
    %18 = arith.addf %14, %17 : vector<8x128xf32>
    %c0_14 = arith.constant 0 : index
    %c3_15 = arith.constant 3 : index
    %19 = memref.load %arg1[%c0_14, %c3_15] : memref<4x4xf32, #tpu.memory_space<smem>>
    %20 = vector.broadcast %19 : f32 to vector<8x128xf32>
    %21 = arith.mulf %20, %7 : vector<8x128xf32>
    %22 = arith.addf %18, %21 : vector<8x128xf32>
    %c0_16 = arith.constant 0 : index
    %23 = memref.load %arg2[%c0_16] : memref<4xf32, #tpu.memory_space<smem>>
    %24 = vector.broadcast %23 : f32 to vector<8x128xf32>
    %25 = arith.addf %22, %24 : vector<8x128xf32>
    %c0_17 = arith.constant 0 : index
    %c0_18 = arith.constant 0 : index
    %c0_19 = arith.constant 0 : index
    %26 = vector.load %arg4[%c0_17, %c0_18, %c0_19] : memref<4x8x128xf32, #tpu.memory_space<vmem>>, vector<1x8x128xf32>
    %27 = vector.shape_cast %26 : vector<1x8x128xf32> to vector<8x128xf32>
    %28 = vector.shape_cast %25 : vector<8x128xf32> to vector<1x8x128xf32>
    tpu.vector_store %arg4[%c0_17, %c0_18, %c0_19], %28 {strides = array<i32>} : memref<4x8x128xf32, #tpu.memory_space<vmem>>, vector<1x8x128xf32>,
    %c1_20 = arith.constant 1 : index
    %c0_21 = arith.constant 0 : index
    %29 = memref.load %arg1[%c1_20, %c0_21] : memref<4x4xf32, #tpu.memory_space<smem>>
    %30 = vector.broadcast %29 : f32 to vector<8x128xf32>
    %31 = arith.mulf %30, %1 : vector<8x128xf32>
    %c1_22 = arith.constant 1 : index
    %c1_23 = arith.constant 1 : index
    %32 = memref.load %arg1[%c1_22, %c1_23] : memref<4x4xf32, #tpu.memory_space<smem>>
    %33 = vector.broadcast %32 : f32 to vector<8x128xf32>
    %34 = arith.mulf %33, %3 : vector<8x128xf32>
    %35 = arith.addf %31, %34 : vector<8x128xf32>
    %c1_24 = arith.constant 1 : index
    %c2_25 = arith.constant 2 : index
    %36 = memref.load %arg1[%c1_24, %c2_25] : memref<4x4xf32, #tpu.memory_space<smem>>
    %37 = vector.broadcast %36 : f32 to vector<8x128xf32>
    %38 = arith.mulf %37, %5 : vector<8x128xf32>
    %39 = arith.addf %35, %38 : vector<8x128xf32>
    %c1_26 = arith.constant 1 : index
    %c3_27 = arith.constant 3 : index
    %40 = memref.load %arg1[%c1_26, %c3_27] : memref<4x4xf32, #tpu.memory_space<smem>>
    %41 = vector.broadcast %40 : f32 to vector<8x128xf32>
    %42 = arith.mulf %41, %7 : vector<8x128xf32>
    %43 = arith.addf %39, %42 : vector<8x128xf32>
    %c1_28 = arith.constant 1 : index
    %44 = memref.load %arg2[%c1_28] : memref<4xf32, #tpu.memory_space<smem>>
    %45 = vector.broadcast %44 : f32 to vector<8x128xf32>
    %46 = arith.addf %43, %45 : vector<8x128xf32>
    %c1_29 = arith.constant 1 : index
    %c0_30 = arith.constant 0 : index
    %c0_31 = arith.constant 0 : index
    %47 = vector.load %arg4[%c1_29, %c0_30, %c0_31] : memref<4x8x128xf32, #tpu.memory_space<vmem>>, vector<1x8x128xf32>
    %48 = vector.shape_cast %47 : vector<1x8x128xf32> to vector<8x128xf32>
    %49 = vector.shape_cast %46 : vector<8x128xf32> to vector<1x8x128xf32>
    tpu.vector_store %arg4[%c1_29, %c0_30, %c0_31], %49 {strides = array<i32>} : memref<4x8x128xf32, #tpu.memory_space<vmem>>, vector<1x8x128xf32>,
    %c2_32 = arith.constant 2 : index
    %c0_33 = arith.constant 0 : index
    %50 = memref.load %arg1[%c2_32, %c0_33] : memref<4x4xf32, #tpu.memory_space<smem>>
    %51 = vector.broadcast %50 : f32 to vector<8x128xf32>
    %52 = arith.mulf %51, %1 : vector<8x128xf32>
    %c2_34 = arith.constant 2 : index
    %c1_35 = arith.constant 1 : index
    %53 = memref.load %arg1[%c2_34, %c1_35] : memref<4x4xf32, #tpu.memory_space<smem>>
    %54 = vector.broadcast %53 : f32 to vector<8x128xf32>
    %55 = arith.mulf %54, %3 : vector<8x128xf32>
    %56 = arith.addf %52, %55 : vector<8x128xf32>
    %c2_36 = arith.constant 2 : index
    %c2_37 = arith.constant 2 : index
    %57 = memref.load %arg1[%c2_36, %c2_37] : memref<4x4xf32, #tpu.memory_space<smem>>
    %58 = vector.broadcast %57 : f32 to vector<8x128xf32>
    %59 = arith.mulf %58, %5 : vector<8x128xf32>
    %60 = arith.addf %56, %59 : vector<8x128xf32>
    %c2_38 = arith.constant 2 : index
    %c3_39 = arith.constant 3 : index
    %61 = memref.load %arg1[%c2_38, %c3_39] : memref<4x4xf32, #tpu.memory_space<smem>>
    %62 = vector.broadcast %61 : f32 to vector<8x128xf32>
    %63 = arith.mulf %62, %7 : vector<8x128xf32>
    %64 = arith.addf %60, %63 : vector<8x128xf32>
    %c2_40 = arith.constant 2 : index
    %65 = memref.load %arg2[%c2_40] : memref<4xf32, #tpu.memory_space<smem>>
    %66 = vector.broadcast %65 : f32 to vector<8x128xf32>
    %67 = arith.addf %64, %66 : vector<8x128xf32>
    %c2_41 = arith.constant 2 : index
    %c0_42 = arith.constant 0 : index
    %c0_43 = arith.constant 0 : index
    %68 = vector.load %arg4[%c2_41, %c0_42, %c0_43] : memref<4x8x128xf32, #tpu.memory_space<vmem>>, vector<1x8x128xf32>
    %69 = vector.shape_cast %68 : vector<1x8x128xf32> to vector<8x128xf32>
    %70 = vector.shape_cast %67 : vector<8x128xf32> to vector<1x8x128xf32>
    tpu.vector_store %arg4[%c2_41, %c0_42, %c0_43], %70 {strides = array<i32>} : memref<4x8x128xf32, #tpu.memory_space<vmem>>, vector<1x8x128xf32>,
    %c3_44 = arith.constant 3 : index
    %c0_45 = arith.constant 0 : index
    %71 = memref.load %arg1[%c3_44, %c0_45] : memref<4x4xf32, #tpu.memory_space<smem>>
    %72 = vector.broadcast %71 : f32 to vector<8x128xf32>
    %73 = arith.mulf %72, %1 : vector<8x128xf32>
    %c3_46 = arith.constant 3 : index
    %c1_47 = arith.constant 1 : index
    %74 = memref.load %arg1[%c3_46, %c1_47] : memref<4x4xf32, #tpu.memory_space<smem>>
    %75 = vector.broadcast %74 : f32 to vector<8x128xf32>
    %76 = arith.mulf %75, %3 : vector<8x128xf32>
    %77 = arith.addf %73, %76 : vector<8x128xf32>
    %c3_48 = arith.constant 3 : index
    %c2_49 = arith.constant 2 : index
    %78 = memref.load %arg1[%c3_48, %c2_49] : memref<4x4xf32, #tpu.memory_space<smem>>
    %79 = vector.broadcast %78 : f32 to vector<8x128xf32>
    %80 = arith.mulf %79, %5 : vector<8x128xf32>
    %81 = arith.addf %77, %80 : vector<8x128xf32>
    %c3_50 = arith.constant 3 : index
    %c3_51 = arith.constant 3 : index
    %82 = memref.load %arg1[%c3_50, %c3_51] : memref<4x4xf32, #tpu.memory_space<smem>>
    %83 = vector.broadcast %82 : f32 to vector<8x128xf32>
    %84 = arith.mulf %83, %7 : vector<8x128xf32>
    %85 = arith.addf %81, %84 : vector<8x128xf32>
    %c3_52 = arith.constant 3 : index
    %86 = memref.load %arg2[%c3_52] : memref<4xf32, #tpu.memory_space<smem>>
    %87 = vector.broadcast %86 : f32 to vector<8x128xf32>
    %88 = arith.addf %85, %87 : vector<8x128xf32>
    %c3_53 = arith.constant 3 : index
    %c0_54 = arith.constant 0 : index
    %c0_55 = arith.constant 0 : index
    %89 = vector.load %arg4[%c3_53, %c0_54, %c0_55] : memref<4x8x128xf32, #tpu.memory_space<vmem>>, vector<1x8x128xf32>
    %90 = vector.shape_cast %89 : vector<1x8x128xf32> to vector<8x128xf32>
    %91 = vector.shape_cast %88 : vector<8x128xf32> to vector<1x8x128xf32>
    tpu.vector_store %arg4[%c3_53, %c0_54, %c0_55], %91 {strides = array<i32>} : memref<4x8x128xf32, #tpu.memory_space<vmem>>, vector<1x8x128xf32>,
    return
  }
  func.func @transform_0(%arg0: i32) -> (i32, i32) {
    %c0_i32 = arith.constant 0 : i32
    %c0_i32_0 = arith.constant 0 : i32
    %c0_i32_1 = arith.constant 0 : i32
    return %c0_i32, %c0_i32_0 : i32, i32
  }
  func.func @transform_1(%arg0: i32) -> i32 {
    %c0_i32 = arith.constant 0 : i32
    %c0_i32_0 = arith.constant 0 : i32
    return %c0_i32 : i32
  }
  func.func @transform_2(%arg0: i32) -> (i32, i32, i32) {
    %c0_i32 = arith.constant 0 : i32
    %c0_i32_0 = arith.constant 0 : i32
    %c0_i32_1 = arith.constant 0 : i32
    return %c0_i32, %c0_i32_0, %arg0 : i32, i32, i32
  }
  func.func @transform_3(%arg0: i32) -> (i32, i32, i32) {
    %c0_i32 = arith.constant 0 : i32
    %c0_i32_0 = arith.constant 0 : i32
    %c0_i32_1 = arith.constant 0 : i32
    return %c0_i32, %c0_i32_0, %arg0 : i32, i32, i32
  }
}

</mosaic_0001>

<llo_original>
// kernel: simplenet_forward.1
$region0: #{simplenet_forward.1}
  #allocation0 [shape = 'u32[]', space=smem, size = 0x4, offset = 0x4, fixed_abs, tag = 'smem constant byte address 0x4 - core index']
  #allocation1 [shape = 'u32[72,128]{1,0:T(1,128)}', space=vmem, size = 0x9000, scoped, tag = 'internal scratch']
  %s0 = inlined_call_operand.vmem [shape: f32[4,4], index: 0, kind: input, shape index: {}]
  %s1 = inlined_call_operand.vmem [shape: f32[4], index: 1, kind: input, shape index: {}]
  %s2 = inlined_call_operand.vmem [shape: f32[4,8,128], index: 2, kind: input, shape index: {}]
  %s3 = inlined_call_operand.vmem [shape: f32[4,8,128], index: 3, kind: output, shape index: {}]
  %s4 = sld [smem:[#allocation0]]
  $region30: #{simplenet_forward.1} parent=0
    _
  %s6 = ssub.s32 1, %s4
  %s7 = scalar_select 0, %s6, %s4
  $region1: #{simplenet_forward.1} parent=0
    #allocation2 [shape = 'u8[2048]{0}', space=smem, size = 0x800, scoped, tag = 'input window, operand 0, single buffered']
    #allocation3 [shape = 's32[1]{0}', space=sflag, size = 0x4, scoped, tag = 'scoped memory for simplenet_forward.1']
    #allocation4 [shape = 'u8[512]{0}', space=smem, size = 0x200, scoped, tag = 'input window, operand 1, single buffered']
    #allocation5 [shape = 's32[1]{0}', space=sflag, size = 0x4, scoped, tag = 'scoped memory for simplenet_forward.1']
    %8 = vsyncpa [#allocation3], 0
    %9 = vsyncpa [#allocation5], 0
    // Predicated region
    $region2: #{simplenet_forward.1} parent=1 // pred_check
      _
    $region3: #{simplenet_forward.1} parent=1 // pred_check_branch
      %11 = sbr.rel (0) target = $region5
    $region4: #{simplenet_forward.1} parent=1 // pred_region
      %13 = vsyncadd [#allocation3], 0
      %s15 = sshll.u32 %s0, 4
      %s16 = int_to_ptr.vmem [resolvable:$true] %s15
      %18 = dma.vmem_to_smem %s16, 64, [#allocation2], [#allocation3]
    $region5: #{simplenet_forward.1} parent=1 // pred_fallthru
      _
    // Predicated region
    $region6: #{simplenet_forward.1} parent=1 // pred_check
      _
    $region7: #{simplenet_forward.1} parent=1 // pred_check_branch
      %20 = sbr.rel (0) target = $region9
    $region8: #{simplenet_forward.1} parent=1 // pred_region
      %22 = vsyncadd [#allocation5], 0
      %s24 = sshll.u32 %s1, 4
      %s25 = int_to_ptr.vmem [resolvable:$true] %s24
      %27 = dma.vmem_to_smem %s25, 16, [#allocation4], [#allocation5]
    $region9: #{simplenet_forward.1} parent=1 // pred_fallthru
      _
    // Predicated region
    $region10: #{simplenet_forward.1} parent=1 // pred_check
      _
    $region11: #{simplenet_forward.1} parent=1 // pred_check_branch
      %29 = sbr.rel (0) target = $region13
    $region12: #{simplenet_forward.1} parent=1 // pred_region
      _
    $region13: #{simplenet_forward.1} parent=1 // pred_fallthru
      _
    // Predicated region
    $region14: #{simplenet_forward.1} parent=1 // pred_check
      _
    $region15: #{simplenet_forward.1} parent=1 // pred_check_branch
      %31 = sbr.rel (0) target = $region17
    $region16: #{simplenet_forward.1} parent=1 // pred_region
      %33 = dma.done [#allocation3], 64
    $region17: #{simplenet_forward.1} parent=1 // pred_fallthru
      _
    // Predicated region
    $region18: #{simplenet_forward.1} parent=1 // pred_check
      _
    $region19: #{simplenet_forward.1} parent=1 // pred_check_branch
      %35 = sbr.rel (0) target = $region21
    $region20: #{simplenet_forward.1} parent=1 // pred_region
      %37 = dma.done [#allocation5], 16
    $region21: #{simplenet_forward.1} parent=1 // pred_fallthru
      _
    %38 = sfence
    %v39 = vld [vmem:[%s2] sm:$0xff]
    %s40 = scalar_lea.vmem %s2, 8
    %v41 = vld [vmem:[%s40] sm:$0xff]
    %s42 = scalar_lea.vmem %s2, 16
    %v43 = vld [vmem:[%s42] sm:$0xff]
    %s44 = scalar_lea.vmem %s2, 24
    %v45 = vld [vmem:[%s44] sm:$0xff]
    %s46 = sld [smem:[#allocation2]]
    %v47 = vstv %s46
    %v48 = vmul.f32 %v47, %v39
    %s49 = sld [smem:[#allocation2 + $0x1]]
    %v50 = vstv %s49
    %v51 = vmul.f32 %v50, %v41
    %v52 = vadd.f32 %v48, %v51
    %s53 = sld [smem:[#allocation2 + $0x2]]
    %v54 = vstv %s53
    %v55 = vmul.f32 %v54, %v43
    %v56 = vadd.f32 %v52, %v55
    %s57 = sld [smem:[#allocation2 + $0x3]]
    %v58 = vstv %s57
    %v59 = vmul.f32 %v58, %v45
    %v60 = vadd.f32 %v56, %v59
    %s61 = sld [smem:[#allocation4]]
    %v62 = vstv %s61
    %v63 = vadd.f32 %v60, %v62
    %64 = vst [vmem:[%s3] sm:$0xff] %v63
    %s65 = sld [smem:[#allocation2 + $0x80]]
    %v66 = vstv %s65
    %v67 = vmul.f32 %v66, %v39
    %s68 = sld [smem:[#allocation2 + $0x81]]
    %v69 = vstv %s68
    %v70 = vmul.f32 %v69, %v41
    %v71 = vadd.f32 %v67, %v70
    %s72 = sld [smem:[#allocation2 + $0x82]]
    %v73 = vstv %s72
    %v74 = vmul.f32 %v73, %v43
    %v75 = vadd.f32 %v71, %v74
    %s76 = sld [smem:[#allocation2 + $0x83]]
    %v77 = vstv %s76
    %v78 = vmul.f32 %v77, %v45
    %v79 = vadd.f32 %v75, %v78
    %s80 = sld [smem:[#allocation4 + $0x1]]
    %v81 = vstv %s80
    %v82 = vadd.f32 %v79, %v81
    %s83 = scalar_lea.vmem %s3, 8
    %84 = vst [vmem:[%s83] sm:$0xff] %v82
    %s85 = sld [smem:[#allocation2 + $0x100]]
    %v86 = vstv %s85
    %v87 = vmul.f32 %v86, %v39
    %s88 = sld [smem:[#allocation2 + $0x101]]
    %v89 = vstv %s88
    %v90 = vmul.f32 %v89, %v41
    %v91 = vadd.f32 %v87, %v90
    %s92 = sld [smem:[#allocation2 + $0x102]]
    %v93 = vstv %s92
    %v94 = vmul.f32 %v93, %v43
    %v95 = vadd.f32 %v91, %v94
    %s96 = sld [smem:[#allocation2 + $0x103]]
    %v97 = vstv %s96
    %v98 = vmul.f32 %v97, %v45
    %v99 = vadd.f32 %v95, %v98
    %s100 = sld [smem:[#allocation4 + $0x2]]
    %v101 = vstv %s100
    %v102 = vadd.f32 %v99, %v101
    %s103 = scalar_lea.vmem %s3, 16
    %104 = vst [vmem:[%s103] sm:$0xff] %v102
    %s105 = sld [smem:[#allocation2 + $0x180]]
    %v106 = vstv %s105
    %v107 = vmul.f32 %v106, %v39
    %s108 = sld [smem:[#allocation2 + $0x181]]
    %v109 = vstv %s108
    %v110 = vmul.f32 %v109, %v41
    %v111 = vadd.f32 %v107, %v110
    %s112 = sld [smem:[#allocation2 + $0x182]]
    %v113 = vstv %s112
    %v114 = vmul.f32 %v113, %v43
    %v115 = vadd.f32 %v111, %v114
    %s116 = sld [smem:[#allocation2 + $0x183]]
    %v117 = vstv %s116
    %v118 = vmul.f32 %v117, %v45
    %v119 = vadd.f32 %v115, %v118
    %s120 = sld [smem:[#allocation4 + $0x3]]
    %v121 = vstv %s120
    %v122 = vadd.f32 %v119, %v121
    %s123 = scalar_lea.vmem %s3, 24
    %124 = vst [vmem:[%s123] sm:$0xff] %v122
    // Predicated region
    $region22: #{simplenet_forward.1} parent=1 // pred_check
      _
    $region23: #{simplenet_forward.1} parent=1 // pred_check_branch
      %126 = sbr.rel (0) target = $region25
    $region24: #{simplenet_forward.1} parent=1 // pred_region
      _
    $region25: #{simplenet_forward.1} parent=1 // pred_fallthru
      _
    // Predicated region
    $region26: #{simplenet_forward.1} parent=1 // pred_check
      _
    $region27: #{simplenet_forward.1} parent=1 // pred_check_branch
      %128 = sbr.rel (0) target = $region29
    $region28: #{simplenet_forward.1} parent=1 // pred_region
      _
    $region29: #{simplenet_forward.1} parent=1 // pred_fallthru
      _
    %129 = vsyncpa [#allocation3], 1
    %130 = vsyncpa [#allocation5], 1

</llo_original>
